<compile_context>
chip_gen: v7x
topology: tpu7x:2x2x1
jax: 0.10.0
libtpu: 0.0.40
codegen_flags: <defaults>
</compile_context>

<pallas_src>
import jax
import jax.numpy as jnp
from jax.experimental import pallas as pl
from jax.experimental.pallas import tpu as pltpu


def _spatial_dropout_kernel(x_ref, mask_ref, o_ref):
    # x_ref: (tm, tl) in x.dtype; mask_ref: (tm, 1) in x.dtype with keep * 1/(1-p) folded in.
    o_ref[...] = (x_ref[...] * mask_ref[...]).astype(o_ref.dtype)


def _choose_tiles(rows: int, l: int, itemsize: int) -> tuple[int, int]:
    """Pick (tm, tl): tm % 8 == 0 (or == rows), tl % 128 == 0 (or == l), ~6 MiB x tile."""
    target = 6 * 1024 * 1024  # per x tile; double-buffered x+out ~24 MiB (v7x-safe)

    # --- lane (L) tiling ---
    row_bytes = l * itemsize
    if 8 * row_bytes <= target or l <= 128:
        tl = l                                              # full L block (always legal)
    else:
        # very long L: lane-dense multiples of 128, aiming for ~64-row tiles
        tl = max(128, (target // (64 * itemsize)) // 128 * 128)
        tl = min(tl, (l // 128) * 128)

    # --- sublane (row) tiling ---
    tm = (target // max(1, tl * itemsize)) // 8 * 8
    tm = max(8, min(tm, 2048))
    if tm >= rows:
        tm = rows                                           # full-extent rows block is legal

    # --- guarantee >= 2 grid steps so v7x's two TensorCores both get work ---
    if pl.cdiv(rows, tm) * pl.cdiv(l, tl) < 2:
        if rows > 8:
            tm = max(8, ((rows + 1) // 2 + 7) // 8 * 8)
            if tm >= rows:
                tm = 8
        elif tl > 256 and tl % 256 == 0:
            tl //= 2
    return tm, tl


def spatial_dropout(x: jax.Array, *, drop_rate: float, rng_key: jax.Array) -> jax.Array:
    """Training-mode SpatialDropout forward. x: (N, C, L)."""
    if drop_rate <= 0.0:
        return x
    if drop_rate >= 1.0:
        return jnp.zeros_like(x)

    n, c, l = x.shape
    rows = n * c

    # Per-channel keep mask with 1/(1-p) scale folded in, cast to x.dtype so the
    # kernel multiply stays in the input dtype (no per-vreg up/down casts).
    scale = 1.0 / (1.0 - float(drop_rate))
    keep = jax.random.bernoulli(rng_key, p=1.0 - float(drop_rate), shape=(rows, 1))
    mask = jnp.where(keep, jnp.asarray(scale, x.dtype), jnp.asarray(0.0, x.dtype))

    x2 = x.reshape(rows, l)
    tm, tl = _choose_tiles(rows, l, jnp.dtype(x.dtype).itemsize)

    out2 = pl.pallas_call(
        _spatial_dropout_kernel,
        out_shape=jax.ShapeDtypeStruct((rows, l), x.dtype),
        grid_spec=pltpu.PrefetchScalarGridSpec(
            num_scalar_prefetch=0,
            grid=(pl.cdiv(rows, tm), pl.cdiv(l, tl)),       # ragged tails OK: OOB writes dropped
            in_specs=[
                pl.BlockSpec((tm, tl), lambda i, j: (i, j)),
                pl.BlockSpec((tm, 1), lambda i, j: (i, 0)),
            ],
            out_specs=pl.BlockSpec((tm, tl), lambda i, j: (i, j)),
        ),
        compiler_params=pltpu.CompilerParams(
            dimension_semantics=("parallel", "parallel"),
            vmem_limit_bytes=48 << 20,                      # big tiles on v5e/v6e, v7x-safe
        ),
    )(x2, mask)

    return out2.reshape(n, c, l)


if __name__ == "__main__":
    drop_rate = 0.3
    key = jax.random.PRNGKey(0)
    key_x, key_drop = jax.random.split(key)

    # Small, lane-dense shape: batch=2, channels=16, length=256.
    N, C, L = 2, 16, 256
    x = jax.random.normal(key_x, (N, C, L), dtype=jnp.float32)

    out = spatial_dropout(x, drop_rate=drop_rate, rng_key=key_drop)
    out = jax.block_until_ready(out)

    # Exact reference: rebuild the same per-channel mask with the same key.
    scale = 1.0 / (1.0 - drop_rate)
    keep_ref = jax.random.bernoulli(key_drop, p=1.0 - drop_rate, shape=(N * C, 1))
    expected = jnp.where(keep_ref, x.reshape(N * C, L) * scale, 0.0).reshape(N, C, L)
    assert out.shape == x.shape and out.dtype == x.dtype
    assert bool(jnp.all(jnp.abs(out - expected.astype(x.dtype)) < 1e-5)), "mismatch vs reference"

    # Dropout2d structural check: each (n, c) row is either all-zero or exactly x * 1/(1-p).
    row_zero = jnp.all(out == 0.0, axis=-1)
    row_scaled = jnp.all(jnp.abs(out - x * scale) < 1e-5, axis=-1)
    assert bool(jnp.all(row_zero | row_scaled)), "per-channel dropout semantics violated"

    print("KERNEL_OK")
</pallas_src>

<mosaic_0001>
module attributes {stable_mosaic.version = 11 : i64} {
  func.func @_spatial_dropout_kernel(%arg0: i32, %arg1: i32, %arg2: memref<16x256xf32, #tpu.memory_space<vmem>>, %arg3: memref<16x1xf32, #tpu.memory_space<vmem>>, %arg4: memref<16x256xf32, #tpu.memory_space<vmem>>) attributes {dimension_semantics = [#tpu.dimension_semantics<parallel>, #tpu.dimension_semantics<parallel>], iteration_bounds = array<i64: 2, 1>, scalar_prefetch = 0 : i64, scratch_operands = 0 : i64, tpu.core_type = #tpu.core_type<tc>, window_params = [{transform_indices = @transform_0, window_bounds = array<i64: 16, 256>}, {transform_indices = @transform_1, window_bounds = array<i64: 16, 1>}, {transform_indices = @transform_2, window_bounds = array<i64: 16, 256>}]} {
    %c0 = arith.constant 0 : index
    %c0_0 = arith.constant 0 : index
    %0 = vector.load %arg2[%c0, %c0_0] : memref<16x256xf32, #tpu.memory_space<vmem>>, vector<16x256xf32>
    %c0_1 = arith.constant 0 : index
    %c0_2 = arith.constant 0 : index
    %1 = vector.load %arg3[%c0_1, %c0_2] : memref<16x1xf32, #tpu.memory_space<vmem>>, vector<16x1xf32>
    %2 = vector.broadcast %1 : vector<16x1xf32> to vector<16x256xf32>
    %3 = arith.mulf %0, %2 : vector<16x256xf32>
    %c0_3 = arith.constant 0 : index
    %c0_4 = arith.constant 0 : index
    %4 = vector.load %arg4[%c0_3, %c0_4] : memref<16x256xf32, #tpu.memory_space<vmem>>, vector<16x256xf32>
    tpu.vector_store %arg4[%c0_3, %c0_4], %3 {strides = array<i32>} : memref<16x256xf32, #tpu.memory_space<vmem>>, vector<16x256xf32>,
    return
  }
  func.func @transform_0(%arg0: i32, %arg1: i32) -> (i32, i32) {
    %c0_i32 = arith.constant 0 : i32
    return %arg0, %arg1 : i32, i32
  }
  func.func @transform_1(%arg0: i32, %arg1: i32) -> (i32, i32) {
    %c0_i32 = arith.constant 0 : i32
    %c0_i32_0 = arith.constant 0 : i32
    return %arg0, %c0_i32 : i32, i32
  }
  func.func @transform_2(%arg0: i32, %arg1: i32) -> (i32, i32) {
    %c0_i32 = arith.constant 0 : i32
    return %arg0, %arg1 : i32, i32
  }
}

</mosaic_0001>

<llo_original>
// kernel: tpu_custom_call.1
$region0: #{tpu_custom_call.1}
  #allocation0 [shape = 'u32[]', space=smem, size = 0x4, offset = 0x4, fixed_abs, tag = 'smem constant byte address 0x4 - core index']
  #allocation1 [shape = 'u32[144,128]{1,0:T(1,128)}', space=vmem, size = 0x12000, scoped, tag = 'internal scratch']
  %s0 = inlined_call_operand.hbm [shape: f32[32,256], index: 0, kind: input, shape index: {}]
  %s1 = inlined_call_operand.vmem [shape: f32[32,1], index: 1, kind: input, shape index: {}]
  %s2 = inlined_call_operand.hbm [shape: f32[32,256], index: 2, kind: output, shape index: {}]
  %s3 = sld [smem:[#allocation0]]
  $region45: #{tpu_custom_call.1} parent=0
    _
  %s5 = ssub.s32 1, %s3
  %s6 = scalar_select 0, %s5, %s3
  $region1: #{tpu_custom_call.1} parent=0
    #allocation2 [shape = 'u8[32768]{0}', space=vmem, size = 0x8000, scoped, tag = 'input window, operand 0']
    #allocation3 [shape = 's32[2]{0}', space=sflag, size = 0x8, scoped, tag = 'scoped memory for tpu_custom_call.1']
    #allocation4 [shape = 's32[2]{0}', space=sflag, size = 0x8, scoped, tag = 'scoped memory for tpu_custom_call.1']
    #allocation5 [shape = 'u8[32768]{0}', space=vmem, size = 0x8000, scoped, tag = 'output window, operand 0']
    %7 = vsyncpa [#allocation3], 0
    %s8 = scalar_lea.sflag [#allocation3], 1
    %9 = vsyncpa %s8, 0
    %10 = vsyncpa [#allocation4], 0
    %s11 = scalar_lea.sflag [#allocation4], 1
    %12 = vsyncpa %s11, 0
    loop: start=0, step=1, limit=4
    $region2: #{tpu_custom_call.1} parent=1 // loop_pre_header
      _
    $region3: #{tpu_custom_call.1} parent=1 // loop_header
      %s14 = sphi 0, %s18
      %p15 = scmp.ge.s32.totalorder %s14, 4
      %s21 = sphi 0, %s33
      %s22 = sphi 0, %s29
      %s23 = sphi 0, %s21
      %s24 = sphi 0, %s22
      %s25 = sphi 0, %s23
      %s26 = sphi 0, %s24
      %s38 = sphi 0, %s40
      %s41 = sphi 0, %s38
      %s42 = sphi 0, %s41
      %s58 = sphi 0, %s42
      %s64 = sphi 0, %s66
      %s67 = sphi 0, %s64
      %s68 = sphi 0, %s67
      %s84 = sphi 0, %s68
      %s92 = sphi 0, %s94
      %s95 = sphi 0, %s92
      %s96 = sphi 0, %s95
      %s112 = sphi 0, %s96
    $region4: #{tpu_custom_call.1} parent=1 // loop_header_branch
      %17 = sbr.rel (%p15) target = $region8
    $region5: #{tpu_custom_call.1} parent=1 // loop_body
      %s19 = ssub.s32 %s14, 1
      %s20 = ssub.s32 %s14, 2
      %s27 = sadd.s32 1, %s22
      %p28 = scmp.ge.s32.totalorder %s27, 1
      %s29 = scalar_select %p28, 0, %s27
      %s30 = sadd.s32 1, %s21
      %s31 = scalar_select %p28, %s30, %s21
      %p32 = scmp.ge.s32.totalorder %s31, 2
      %s33 = scalar_select %p32, 0, %s31
      %s34 = ssub.s32 %s21, %s33
      %s35 = ssub.s32 %s22, %s29
      %s36 = sor.u32 %s34, %s35
      %p37 = scmp.eq.s32.totalorder %s36, 0
      %s39 = sadd.s32 %s38, 1
      %s40 = scalar_select %p37, %s38, %s39
      %p43 = pneg %p37
      %p44 = scmp.eq.s32.totalorder %s14, 1
      %p45 = por %p43, %p44
      %p46 = scmp.ne.s32.totalorder %s38, %s41
      %p47 = scmp.eq.s32.totalorder %s14, 0
      %p48 = por %p46, %p47
      %p49 = scmp.ne.s32.totalorder %s38, %s41
      %p50 = scmp.eq.s32.totalorder %s19, 1
      %p51 = por %p49, %p50
      %p52 = scmp.ne.s32.totalorder %s41, %s42
      %p53 = scmp.eq.s32.totalorder %s19, 0
      %p54 = por %p52, %p53
      %p55 = scmp.ne.s32.totalorder %s41, %s42
      %p56 = scmp.eq.s32.totalorder %s20, 1
      %p57 = por %p55, %p56
      %p59 = scmp.ne.s32.totalorder %s42, %s58
      %p60 = scmp.eq.s32.totalorder %s20, 0
      %p61 = por %p59, %p60
      %s62 = ssub.s32 %s21, %s33
      %p63 = scmp.eq.s32.totalorder %s62, 0
      %s65 = sadd.s32 %s64, 1
      %s66 = scalar_select %p63, %s64, %s65
      %p69 = pneg %p63
      %p70 = scmp.eq.s32.totalorder %s14, 1
      %p71 = por %p69, %p70
      %p72 = scmp.ne.s32.totalorder %s64, %s67
      %p73 = scmp.eq.s32.totalorder %s14, 0
      %p74 = por %p72, %p73
      %p75 = scmp.ne.s32.totalorder %s64, %s67
      %p76 = scmp.eq.s32.totalorder %s19, 1
      %p77 = por %p75, %p76
      %p78 = scmp.ne.s32.totalorder %s67, %s68
      %p79 = scmp.eq.s32.totalorder %s19, 0
      %p80 = por %p78, %p79
      %p81 = scmp.ne.s32.totalorder %s67, %s68
      %p82 = scmp.eq.s32.totalorder %s20, 1
      %p83 = por %p81, %p82
      %p85 = scmp.ne.s32.totalorder %s68, %s84
      %p86 = scmp.eq.s32.totalorder %s20, 0
      %p87 = por %p85, %p86
      %s88 = ssub.s32 %s21, %s33
      %s89 = ssub.s32 %s22, %s29
      %s90 = sor.u32 %s88, %s89
      %p91 = scmp.eq.s32.totalorder %s90, 0
      %s93 = sadd.s32 %s92, 1
      %s94 = scalar_select %p91, %s92, %s93
      %p97 = pneg %p91
      %p98 = scmp.eq.s32.totalorder %s14, 1
      %p99 = por %p97, %p98
      %p100 = scmp.ne.s32.totalorder %s92, %s95
      %p101 = scmp.eq.s32.totalorder %s14, 0
      %p102 = por %p100, %p101
      %p103 = scmp.ne.s32.totalorder %s92, %s95
      %p104 = scmp.eq.s32.totalorder %s19, 1
      %p105 = por %p103, %p104
      %p106 = scmp.ne.s32.totalorder %s95, %s96
      %p107 = scmp.eq.s32.totalorder %s19, 0
      %p108 = por %p106, %p107
      %p109 = scmp.ne.s32.totalorder %s95, %s96
      %p110 = scmp.eq.s32.totalorder %s20, 1
      %p111 = por %p109, %p110
      %p113 = scmp.ne.s32.totalorder %s96, %s112
      %p114 = scmp.eq.s32.totalorder %s20, 0
      %p115 = por %p113, %p114
      %p116 = scmp.le.s32.totalorder 1, %s14
      %p117 = scmp.lt.s32.totalorder %s14, 3
      %p118 = pnand %p116, %p117
      %p119 = pneg %p118
      // Predicated region
      $region9: #{tpu_custom_call.1} parent=5 // pred_check
        _
      $region10: #{tpu_custom_call.1} parent=5 // pred_check_branch
        %121 = sbr.rel (%p118) target = $region12
      $region11: #{tpu_custom_call.1} parent=5 // pred_region
        %s122 = ssub.s32 %s14, 1
      $region12: #{tpu_custom_call.1} parent=5 // pred_fallthru
        _
      %p123 = scmp.lt.s32.totalorder %s14, 2
      // Predicated region
      $region13: #{tpu_custom_call.1} parent=5 // pred_check
        %p124 = pneg %p123
      $region14: #{tpu_custom_call.1} parent=5 // pred_check_branch
        %126 = sbr.rel (%p124) target = $region16
      $region15: #{tpu_custom_call.1} parent=5 // pred_region
        // Predicated region
        $region17: #{tpu_custom_call.1} parent=15 // pred_check
          %p127 = pneg %p48
        $region18: #{tpu_custom_call.1} parent=15 // pred_check_branch
          %129 = sbr.rel (%p127) target = $region20
        $region19: #{tpu_custom_call.1} parent=15 // pred_region
          %s130 = sand.u32 %s38, 1
          %s131 = scalar_lea.sflag [#allocation3], %s130
          %s132 = sand.u32 %s38, 1
          %s133 = smul.addr %s132, 32
          %s134 = scalar_lea.vmem [#allocation2], %s133
          %s135 = smul.u32 2, %s21
          %s136 = smul.u32 2, %s22
          %s138 = ssub.s32 512, 512
          %139 = vsyncadd %s131, %s138
          %s140 = smul.addr %s135, 2
          %s141 = sadd.s32 %s136, %s140
          %s142 = smul.addr %s141, 128
          %s143 = scalar_lea.hbm %s0, %s142
          %s144 = sshll.u32 %s134, 4
          %s145 = int_to_ptr.vmem [resolvable:$true] %s144
          %150 = dma.hbm_to_vmem [thread:$0]  %s143, 512, %s145, %s131, 256, 256, 16
        $region20: #{tpu_custom_call.1} parent=15 // pred_fallthru
          _
        // Predicated region
        $region21: #{tpu_custom_call.1} parent=15 // pred_check
          %p151 = pneg %p74
        $region22: #{tpu_custom_call.1} parent=15 // pred_check_branch
          %153 = sbr.rel (%p151) target = $region24
        $region23: #{tpu_custom_call.1} parent=15 // pred_region
          %s154 = smul.u32 2, %s21
          %p155 = scmp.lt.s32.totalorder %s154, 3
          %s156 = scalar_select %p155, %s154, 3
          %s157 = smul.addr %s156, 8
          %s158 = scalar_lea.vmem %s1, %s157
          %s159 = smul.u32 2, %s21
        $region24: #{tpu_custom_call.1} parent=15 // pred_fallthru
          _
      $region16: #{tpu_custom_call.1} parent=5 // pred_fallthru
        _
      %p160 = scmp.le.s32.totalorder 1, %s14
      %p161 = scmp.lt.s32.totalorder %s14, 3
      %p162 = pnand %p160, %p161
      %p163 = pneg %p162
      // Predicated region
      $region25: #{tpu_custom_call.1} parent=5 // pred_check
        _
      $region26: #{tpu_custom_call.1} parent=5 // pred_check_branch
        %165 = sbr.rel (%p162) target = $region28
      $region27: #{tpu_custom_call.1} parent=5 // pred_region
        %s166 = ssub.s32 %s14, 1
        %s167 = sand.u32 %s41, 1
        %s168 = scalar_lea.sflag [#allocation3], %s167
        %s169 = sand.u32 %s41, 1
        %s170 = smul.addr %s169, 32
        %s171 = scalar_lea.vmem [#allocation2], %s170
        // Predicated region
        $region29: #{tpu_custom_call.1} parent=27 // pred_check
          %p172 = pneg %p54
        $region30: #{tpu_custom_call.1} parent=27 // pred_check_branch
          %174 = sbr.rel (%p172) target = $region32
        $region31: #{tpu_custom_call.1} parent=27 // pred_region
          %175 = dma.done %s168, 512
        $region32: #{tpu_custom_call.1} parent=27 // pred_fallthru
          _
        %s176 = sand.u32 %s41, 1
        %s177 = scalar_lea.sflag [#allocation3], %s176
        %s178 = sand.u32 %s41, 1
        %s179 = smul.addr %s178, 32
        %s180 = scalar_lea.vmem [#allocation2], %s179
        %p181 = pneg %p54
        %p182 = pneg %p51
        %s183 = smul.u32 2, %s23
        %p184 = scmp.lt.s32.totalorder %s183, 3
        %s185 = scalar_select %p184, %s183, 3
        %s186 = smul.addr %s185, 8
        %s187 = scalar_lea.vmem %s1, %s186
        %p188 = pneg %p80
        %p189 = pneg %p77
        %p190 = pneg %p108
        %p191 = pneg %p105
        %s192 = sand.u32 %s95, 1
        %s193 = scalar_lea.sflag [#allocation4], %s192
        %s194 = sand.u32 %s95, 1
        %s195 = smul.addr %s194, 32
        %s196 = scalar_lea.vmem [#allocation5], %s195
        %s197 = smul.u32 2, %s23
        %s198 = smul.u32 2, %s24
        %s199 = smul.u32 2, %s23
        %p200 = scmp.lt.s32.totalorder %s199, 3
        %s201 = scalar_select %p200, %s199, 3
        %s202 = smul.addr %s201, 8
        %s203 = scalar_lea.vmem %s1, %s202
        %s204 = smul.u32 2, %s23
        %s205 = smul.u32 2, %s23
        %s206 = smul.u32 2, %s24
        %v207 = vld [vmem:[%s171] sm:$0xff]
        %v208 = vld [vmem:[%s171 + $0x8] sm:$0xff]
        %v209 = vld [vmem:[%s171 + $0x10] sm:$0xff]
        %v210 = vld [vmem:[%s171 + $0x18] sm:$0xff]
        %v211 = vld [vmem:[%s203] sm:$0xff]
        %v212 = vld [vmem:[%s203 + $0x8] sm:$0xff]
        %214 = vset.pattern.permute.xlu0 0
        %215 = vperm.xlu0 %214, %v211
        %v216 = vpop.permute.xlu0 %215
        %219 = vset.pattern.permute.xlu0 0
        %220 = vperm.xlu0 %219, %v212
        %v221 = vpop.permute.xlu0 %220
        %v223 = vmul.f32 %v207, %v216
        %v224 = vmul.f32 %v208, %v216
        %v225 = vmul.f32 %v209, %v221
        %v226 = vmul.f32 %v210, %v221
        %227 = vst [vmem:[%s196] sm:$0xff] %v223
        %228 = vst [vmem:[%s196 + $0x8] sm:$0xff] %v224
        %229 = vst [vmem:[%s196 + $0x10] sm:$0xff] %v225
        %230 = vst [vmem:[%s196 + $0x18] sm:$0xff] %v226
        %s231 = sand.u32 %s95, 1
        %s232 = scalar_lea.sflag [#allocation4], %s231
        %s233 = sand.u32 %s95, 1
        %s234 = smul.addr %s233, 32
        %s235 = scalar_lea.vmem [#allocation5], %s234
        // Predicated region
        $region33: #{tpu_custom_call.1} parent=27 // pred_check
          %p236 = pneg %p105
        $region34: #{tpu_custom_call.1} parent=27 // pred_check_branch
          %238 = sbr.rel (%p236) target = $region36
        $region35: #{tpu_custom_call.1} parent=27 // pred_region
          %s239 = smul.u32 2, %s23
          %s240 = smul.u32 2, %s24
          %s242 = ssub.s32 512, 512
          %243 = vsyncadd %s232, %s242
          %s244 = smul.addr %s239, 2
          %s245 = sadd.s32 %s240, %s244
          %s246 = smul.addr %s245, 128
          %s247 = scalar_lea.hbm %s2, %s246
          %s248 = sshll.u32 %s235, 4
          %s249 = int_to_ptr.vmem [resolvable:$true] %s248
          %254 = dma.vmem_to_hbm [thread:$0]  %s249, 512, %s247, %s232, 256, 256, 16
        $region36: #{tpu_custom_call.1} parent=27 // pred_fallthru
          _
      $region28: #{tpu_custom_call.1} parent=5 // pred_fallthru
        _
      %p255 = scmp.le.s32.totalorder 2, %s14
      // Predicated region
      $region37: #{tpu_custom_call.1} parent=5 // pred_check
        %p256 = pneg %p255
      $region38: #{tpu_custom_call.1} parent=5 // pred_check_branch
        %258 = sbr.rel (%p256) target = $region40
      $region39: #{tpu_custom_call.1} parent=5 // pred_region
        %s259 = ssub.s32 %s14, 2
        // Predicated region
        $region41: #{tpu_custom_call.1} parent=39 // pred_check
          %p260 = pneg %p111
        $region42: #{tpu_custom_call.1} parent=39 // pred_check_branch
          %262 = sbr.rel (%p260) target = $region44
        $region43: #{tpu_custom_call.1} parent=39 // pred_region
          %s263 = sand.u32 %s96, 1
          %s264 = scalar_lea.sflag [#allocation4], %s263
          %s265 = sand.u32 %s96, 1
          %s266 = smul.addr %s265, 32
          %s267 = scalar_lea.vmem [#allocation5], %s266
          %268 = dma.done %s264, 512
        $region44: #{tpu_custom_call.1} parent=39 // pred_fallthru
          _
      $region40: #{tpu_custom_call.1} parent=5 // pred_fallthru
        _
    $region6: #{tpu_custom_call.1} parent=1 // loop_footer
      %s18 = sadd.s32 1, %s14
    $region7: #{tpu_custom_call.1} parent=1 // loop_footer_branch
      %13 = sbr.rel target = $region3
    $region8: #{tpu_custom_call.1} parent=1 // loop_exit
      _
    %269 = vsyncpa [#allocation3], 1
    %s270 = scalar_lea.sflag [#allocation3], 1
    %271 = vsyncpa %s270, 1
    %272 = vsyncpa [#allocation4], 1
    %s273 = scalar_lea.sflag [#allocation4], 1
    %274 = vsyncpa %s273, 1

</llo_original>
